<compile_context>
chip_gen: v5e
topology: v5e:2x2
jax: 0.10.0
libtpu: 0.0.40
codegen_flags: <defaults>
</compile_context>

<pallas_src>
import numpy as np
import jax
import jax.numpy as jnp
from jax.experimental import pallas as pl
from jax.experimental.pallas import tpu as pltpu


_NEG_SLOPE = 0.01    # nn.LeakyReLU default negative slope


# -----------------------------------------------------------------------------
# Fused kernel: all K coupling layers for one row-tile.
#   x_ref : (tm, dim)                        input rows (f32)
#   q_ref : (K, dim, dim)        f32         per-flow de-interleave permutations
#   w1/b1 : (K, dim, 2h) bf16 / (K, 1, 2h)   Q-folded fused [s|t] layer 1
#   w2/b2 : (K, 2h, 2h)  bf16 / (K, 1, 2h)   block-diag layer 2
#   w3/b3 : (K, 2h, dim+1) bf16 / (K,1,dim+1) block-diag layer 3 -> [s|t|sum(s)]
#   out   : (tm, (K+1)*dim + 1)              [z_0 | z_1 | ... | z_K | log_det]
# -----------------------------------------------------------------------------
def _nf_fused_kernel(x_ref, q_ref, w1_ref, b1_ref, w2_ref, b2_ref,
                     w3_ref, b3_ref, out_ref):
    num_flows = q_ref.shape[0]
    dim = x_ref.shape[1]
    d2 = dim // 2

    def leaky_relu(h):
        return jnp.where(h > 0, h, _NEG_SLOPE * h)

    x = x_ref[...].astype(jnp.float32)                           # (tm, dim)
    zs = [x]
    log_det = jnp.zeros((x.shape[0], 1), dtype=jnp.float32)

    for k in range(num_flows):                                   # static unroll
        parity = k % 2

        # ---- serial chain: conditioner only (Q[:, :d2] folded into w1) ----
        h = jnp.dot(x.astype(jnp.bfloat16), w1_ref[k],
                    preferred_element_type=jnp.float32) + b1_ref[k]
        h = leaky_relu(h)
        h = jnp.dot(h.astype(jnp.bfloat16), w2_ref[k],
                    preferred_element_type=jnp.float32) + b2_ref[k]
        h = leaky_relu(h)
        st = jnp.dot(h.astype(jnp.bfloat16), w3_ref[k],
                     preferred_element_type=jnp.float32) + b3_ref[k]
        s = st[:, :d2]
        t = st[:, d2:dim]
        s_sum = st[:, dim:dim + 1]                               # MXU row-sum of s

        # ---- off the chain (depends only on x): exact f32 de-interleave ----
        # xq = [conditioning half | half to transform]; overlaps conditioner.
        xq = jnp.dot(x, q_ref[k], preferred_element_type=jnp.float32)
        x0 = xq[:, :d2]
        x1 = xq[:, d2:]

        z1 = jnp.exp(s) * x1 + t                                 # transformed half
        x = (jnp.concatenate([z1, x0], axis=1) if parity
             else jnp.concatenate([x0, z1], axis=1))             # next flow input
        log_det = log_det + s_sum
        zs.append(x)

    # Single coalesced store: every intermediate z plus log_det, no padding.
    out_ref[...] = jnp.concatenate(zs + [log_det], axis=1).astype(out_ref.dtype)


# -----------------------------------------------------------------------------
# Row-tile selection: VMEM-budget derived, megacore-aware, pad-friendly.
# -----------------------------------------------------------------------------
def _cdiv(a, b):
    return -(-a // b)


def _round_up(a, b):
    return _cdiv(a, b) * b


def _pick_row_tile(m, dim, num_flows):
    out_w = (num_flows + 1) * dim + 1
    row_bytes = 4 * 2 * (dim + out_w)     # double-buffered input + output slab, f32
    budget = 24 << 20                     # < 32 MiB default scoped VMEM on all gens
    cap = max(8, (budget // row_bytes) // 8 * 8)
    n_tiles = max(1, _cdiv(m, cap))
    if m > 512:
        n_tiles = max(2, n_tiles)         # >= 2 grid steps -> both v7x TensorCores
    return min(cap, _round_up(_cdiv(m, n_tiles), 8))


# -----------------------------------------------------------------------------
# Wrapper: one pallas_call over a (parallel) row grid.
# -----------------------------------------------------------------------------
def normalizing_flow_forward(x, packed):
    """Fused NormalizingFlow.forward: returns (zs list of len K+1, log_det (m,))."""
    q_all, w1, b1, w2, b2, w3, b3 = packed
    m, dim = x.shape
    num_flows = q_all.shape[0]
    d2 = dim // 2
    h2 = w1.shape[-1]
    out_w = (num_flows + 1) * dim + 1

    tile_m = _pick_row_tile(m, dim, num_flows)
    m_pad = _round_up(m, tile_m)
    if m_pad != m:                        # pad ragged batches; tail rows sliced off
        x = jnp.pad(x, ((0, m_pad - m), (0, 0)))
    grid = (m_pad // tile_m,)

    def pinned(arr):                      # whole-array weight block, never re-fetched
        nd = arr.ndim
        return pl.BlockSpec(arr.shape, lambda i, _nd=nd: (0,) * _nd)

    x_spec = pl.BlockSpec((tile_m, dim), lambda i: (i, 0))
    out_spec = pl.BlockSpec((tile_m, out_w), lambda i: (i, 0))

    flops = (2 * num_flows * m_pad
             * (dim * dim + dim * h2 + h2 * h2 + h2 * (dim + 1))
             + 6 * num_flows * m_pad * d2)
    transcendentals = num_flows * m_pad * d2
    bytes_accessed = (4 * x.size + 4 * q_all.size
                      + 2 * (w1.size + w2.size + w3.size)
                      + 4 * (b1.size + b2.size + b3.size)
                      + 4 * m_pad * out_w)

    slab = pl.pallas_call(
        _nf_fused_kernel,
        out_shape=jax.ShapeDtypeStruct((m_pad, out_w), jnp.float32),
        grid_spec=pltpu.PrefetchScalarGridSpec(
            num_scalar_prefetch=0,
            grid=grid,
            in_specs=[x_spec, pinned(q_all), pinned(w1), pinned(b1),
                      pinned(w2), pinned(b2), pinned(w3), pinned(b3)],
            out_specs=out_spec,
        ),
        compiler_params=pltpu.CompilerParams(
            dimension_semantics=("parallel",)),
        cost_estimate=pl.CostEstimate(
            flops=flops, transcendentals=transcendentals,
            bytes_accessed=bytes_accessed),
    )(x, q_all, w1, b1, w2, b2, w3, b3)

    slab = slab[:m]
    zs_stacked = slab[:, :(num_flows + 1) * dim].reshape(
        m, num_flows + 1, dim).transpose(1, 0, 2)
    log_det = slab[:, (num_flows + 1) * dim]
    zs = [zs_stacked[k] for k in range(num_flows + 1)]
    return zs, log_det


# -----------------------------------------------------------------------------
# Parameter construction & packing.
# Each flow has an s-net and a t-net: Linear(d/2,h) -> LeakyReLU ->
# Linear(h,h) -> LeakyReLU -> Linear(h,d/2).
# -----------------------------------------------------------------------------
def make_flow_params(key, num_flows, dim, hidden):
    d2 = dim // 2
    params = []
    for _ in range(num_flows):
        flow = []
        for _net in range(2):  # s-net, then t-net
            shapes = [(d2, hidden), (hidden,), (hidden, hidden), (hidden,),
                      (hidden, d2), (d2,)]
            for shp in shapes:
                key, sub = jax.random.split(key)
                flow.append(0.1 * jax.random.normal(sub, shp, dtype=jnp.float32))
        params.append(tuple(flow))
    return params


def _perm_matrix(dim, parity):
    """x @ Q == [x[:, parity::2] | x[:, (1-parity)::2]]  (cond half | other half)."""
    d2 = dim // 2
    q = np.zeros((dim, dim), dtype=np.float32)
    for j in range(d2):
        q[2 * j + parity, j] = 1.0
        q[2 * j + 1 - parity, d2 + j] = 1.0
    return q


def pack_flow_params(raw_params, dim):
    """Fold the de-interleave into layer 1, fuse s|t nets (block-diag layers 2/3),
    append an MXU sum(s) column to layer 3, and stack per-flow slabs.
    Conditioner weights stored in bf16; permutations / biases stay f32."""
    d2 = dim // 2
    q_l, w1_l, b1_l, w2_l, b2_l, w3_l, b3_l = [], [], [], [], [], [], []
    for k, p in enumerate(raw_params):
        (sw1, sb1, sw2, sb2, sw3, sb3, tw1, tb1, tw2, tb2, tw3, tb3) = p
        h = sw1.shape[1]
        q = _perm_matrix(dim, k % 2)
        q_l.append(q)
        w1_st = jnp.concatenate([sw1, tw1], axis=1)                       # (d2, 2h)
        w1_l.append(jnp.asarray(q[:, :d2]) @ w1_st)                       # (dim, 2h)
        b1_l.append(jnp.concatenate([sb1, tb1])[None, :])                 # (1, 2h)
        zhh = jnp.zeros((h, h), jnp.float32)
        w2_l.append(jnp.concatenate([
            jnp.concatenate([sw2, zhh], axis=1),
            jnp.concatenate([zhh, tw2], axis=1)], axis=0))                # (2h, 2h)
        b2_l.append(jnp.concatenate([sb2, tb2])[None, :])                 # (1, 2h)
        zhd = jnp.zeros((h, d2), jnp.float32)
        w3_blk = jnp.concatenate([
            jnp.concatenate([sw3, zhd], axis=1),
            jnp.concatenate([zhd, tw3], axis=1)], axis=0)                 # (2h, dim)
        s_sum_col = jnp.concatenate([jnp.sum(sw3, axis=1, keepdims=True),
                                     jnp.zeros((h, 1), jnp.float32)], axis=0)
        w3_l.append(jnp.concatenate([w3_blk, s_sum_col], axis=1))         # (2h, dim+1)
        b3_l.append(jnp.concatenate(
            [sb3, tb3, jnp.sum(sb3)[None]])[None, :])                     # (1, dim+1)
    to_bf16 = lambda xs: jnp.stack(xs).astype(jnp.bfloat16)
    return (jnp.asarray(np.stack(q_l)),
            to_bf16(w1_l), jnp.stack(b1_l),
            to_bf16(w2_l), jnp.stack(b2_l),
            to_bf16(w3_l), jnp.stack(b3_l))


# -----------------------------------------------------------------------------
# Pure-JAX reference (mirrors the PyTorch semantics exactly) for verification.
# -----------------------------------------------------------------------------
def reference_forward(x, raw_params):
    m, _ = x.shape
    log_det = jnp.zeros((m,), jnp.float32)
    zs = [x]

    def mlp(h, w1, b1, w2, b2, w3, b3):
        h = h @ w1 + b1
        h = jnp.where(h > 0, h, _NEG_SLOPE * h)
        h = h @ w2 + b2
        h = jnp.where(h > 0, h, _NEG_SLOPE * h)
        return h @ w3 + b3

    for k, p in enumerate(raw_params):
        (sw1, sb1, sw2, sb2, sw3, sb3, tw1, tb1, tw2, tb2, tw3, tb3) = p
        parity = k % 2
        x0, x1 = x[:, ::2], x[:, 1::2]
        if parity:
            x0, x1 = x1, x0
        s = mlp(x0, sw1, sb1, sw2, sb2, sw3, sb3)
        t = mlp(x0, tw1, tb1, tw2, tb2, tw3, tb3)
        z1 = jnp.exp(s) * x1 + t
        z0 = x0
        if parity:
            z0, z1 = z1, z0
        x = jnp.concatenate([z0, z1], axis=1)
        log_det = log_det + jnp.sum(s, axis=1)
        zs.append(x)
    return zs, log_det


if __name__ == "__main__":
    M, DIM, HIDDEN, NUM_FLOWS = 8, 16, 32, 3

    key = jax.random.PRNGKey(0)
    key, xkey, pkey = jax.random.split(key, 3)
    x = jax.random.normal(xkey, (M, DIM), dtype=jnp.float32)
    raw_params = make_flow_params(pkey, NUM_FLOWS, DIM, HIDDEN)
    packed = pack_flow_params(raw_params, DIM)

    fwd = jax.jit(normalizing_flow_forward)
    zs, log_det = fwd(x, packed)
    jax.block_until_ready(log_det)
    for z in zs:
        jax.block_until_ready(z)

    assert len(zs) == NUM_FLOWS + 1
    assert zs[-1].shape == (M, DIM)
    assert log_det.shape == (M,)

    # Numerical check vs. plain-JAX f32 reference.  Tolerance covers bf16
    # conditioner weights/activations (f32 MXU accumulation) vs XLA f32.
    zs_ref, ld_ref = reference_forward(x, raw_params)
    for a, b in zip(zs, zs_ref):
        assert jnp.allclose(a, b, rtol=2e-2, atol=2e-2)
    assert jnp.allclose(log_det, ld_ref, rtol=2e-2, atol=2e-2)

    print("KERNEL_OK")
</pallas_src>

<mosaic_0001>
module attributes {stable_mosaic.version = 11 : i64} {
  func.func @_nf_fused_kernel(%arg0: i32, %arg1: memref<8x16xf32, #tpu.memory_space<vmem>>, %arg2: memref<3x16x16xf32, #tpu.memory_space<vmem>>, %arg3: memref<3x16x64xbf16, #tpu.memory_space<vmem>>, %arg4: memref<3x1x64xf32, #tpu.memory_space<vmem>>, %arg5: memref<3x64x64xbf16, #tpu.memory_space<vmem>>, %arg6: memref<3x1x64xf32, #tpu.memory_space<vmem>>, %arg7: memref<3x64x17xbf16, #tpu.memory_space<vmem>>, %arg8: memref<3x1x17xf32, #tpu.memory_space<vmem>>, %arg9: memref<8x65xf32, #tpu.memory_space<vmem>>) attributes {dimension_semantics = [#tpu.dimension_semantics<parallel>], iteration_bounds = array<i64: 1>, scalar_prefetch = 0 : i64, scratch_operands = 0 : i64, tpu.core_type = #tpu.core_type<tc>, window_params = [{transform_indices = @transform_0, window_bounds = array<i64: 8, 16>}, {pipeline_mode = #tpu.pipeline_mode<synchronous>, transform_indices = @transform_1, window_bounds = array<i64: 3, 16, 16>}, {pipeline_mode = #tpu.pipeline_mode<synchronous>, transform_indices = @transform_2, window_bounds = array<i64: 3, 16, 64>}, {pipeline_mode = #tpu.pipeline_mode<synchronous>, transform_indices = @transform_3, window_bounds = array<i64: 3, 1, 64>}, {pipeline_mode = #tpu.pipeline_mode<synchronous>, transform_indices = @transform_4, window_bounds = array<i64: 3, 64, 64>}, {pipeline_mode = #tpu.pipeline_mode<synchronous>, transform_indices = @transform_5, window_bounds = array<i64: 3, 1, 64>}, {pipeline_mode = #tpu.pipeline_mode<synchronous>, transform_indices = @transform_6, window_bounds = array<i64: 3, 64, 17>}, {pipeline_mode = #tpu.pipeline_mode<synchronous>, transform_indices = @transform_7, window_bounds = array<i64: 3, 1, 17>}, {transform_indices = @transform_8, window_bounds = array<i64: 8, 65>}]} {
    %c0 = arith.constant 0 : index
    %c0_0 = arith.constant 0 : index
    %0 = vector.load %arg1[%c0, %c0_0] : memref<8x16xf32, #tpu.memory_space<vmem>>, vector<8x16xf32>
    %cst = arith.constant 0.000000e+00 : f32
    %1 = vector.broadcast %cst : f32 to vector<8x1xf32>
    %2 = arith.truncf %0 : vector<8x16xf32> to vector<8x16xbf16>
    %c0_1 = arith.constant 0 : index
    %c0_2 = arith.constant 0 : index
    %c0_3 = arith.constant 0 : index
    %3 = vector.load %arg3[%c0_1, %c0_2, %c0_3] : memref<3x16x64xbf16, #tpu.memory_space<vmem>>, vector<1x16x64xbf16>
    %4 = vector.shape_cast %3 : vector<1x16x64xbf16> to vector<16x64xbf16>
    %cst_4 = arith.constant dense<0.000000e+00> : vector<8x64xf32>
    %5 = tpu.matmul %2, %4, %cst_4 {dimension_numbers = #tpu.dot_dimension_numbers<[1], [0], [0], [1], [0, 0, 1, 1], [], []>} : vector<8x16xbf16>, vector<16x64xbf16>, vector<8x64xf32> -> vector<8x64xf32>
    %c0_5 = arith.constant 0 : index
    %c0_6 = arith.constant 0 : index
    %c0_7 = arith.constant 0 : index
    %6 = vector.load %arg4[%c0_5, %c0_6, %c0_7] : memref<3x1x64xf32, #tpu.memory_space<vmem>>, vector<1x1x64xf32>
    %7 = vector.shape_cast %6 : vector<1x1x64xf32> to vector<1x64xf32>
    %8 = vector.broadcast %7 : vector<1x64xf32> to vector<8x64xf32>
    %9 = arith.addf %5, %8 : vector<8x64xf32>
    %cst_8 = arith.constant 0.000000e+00 : f32
    %10 = vector.broadcast %cst_8 : f32 to vector<8x64xf32>
    %11 = arith.cmpf ogt, %9, %10 : vector<8x64xf32>
    %cst_9 = arith.constant 0.00999999977 : f32
    %12 = vector.broadcast %cst_9 : f32 to vector<8x64xf32>
    %13 = arith.mulf %12, %9 : vector<8x64xf32>
    %14 = arith.select %11, %9, %13 : vector<8x64xi1>, vector<8x64xf32>
    %15 = arith.truncf %14 : vector<8x64xf32> to vector<8x64xbf16>
    %c0_10 = arith.constant 0 : index
    %c0_11 = arith.constant 0 : index
    %c0_12 = arith.constant 0 : index
    %16 = vector.load %arg5[%c0_10, %c0_11, %c0_12] : memref<3x64x64xbf16, #tpu.memory_space<vmem>>, vector<1x64x64xbf16>
    %17 = vector.shape_cast %16 : vector<1x64x64xbf16> to vector<64x64xbf16>
    %cst_13 = arith.constant dense<0.000000e+00> : vector<8x64xf32>
    %18 = tpu.matmul %15, %17, %cst_13 {dimension_numbers = #tpu.dot_dimension_numbers<[1], [0], [0], [1], [0, 0, 1, 1], [], []>} : vector<8x64xbf16>, vector<64x64xbf16>, vector<8x64xf32> -> vector<8x64xf32>
    %c0_14 = arith.constant 0 : index
    %c0_15 = arith.constant 0 : index
    %c0_16 = arith.constant 0 : index
    %19 = vector.load %arg6[%c0_14, %c0_15, %c0_16] : memref<3x1x64xf32, #tpu.memory_space<vmem>>, vector<1x1x64xf32>
    %20 = vector.shape_cast %19 : vector<1x1x64xf32> to vector<1x64xf32>
    %21 = vector.broadcast %20 : vector<1x64xf32> to vector<8x64xf32>
    %22 = arith.addf %18, %21 : vector<8x64xf32>
    %cst_17 = arith.constant 0.000000e+00 : f32
    %23 = vector.broadcast %cst_17 : f32 to vector<8x64xf32>
    %24 = arith.cmpf ogt, %22, %23 : vector<8x64xf32>
    %cst_18 = arith.constant 0.00999999977 : f32
    %25 = vector.broadcast %cst_18 : f32 to vector<8x64xf32>
    %26 = arith.mulf %25, %22 : vector<8x64xf32>
    %27 = arith.select %24, %22, %26 : vector<8x64xi1>, vector<8x64xf32>
    %28 = arith.truncf %27 : vector<8x64xf32> to vector<8x64xbf16>
    %c0_19 = arith.constant 0 : index
    %c0_20 = arith.constant 0 : index
    %c0_21 = arith.constant 0 : index
    %29 = vector.load %arg7[%c0_19, %c0_20, %c0_21] : memref<3x64x17xbf16, #tpu.memory_space<vmem>>, vector<1x64x17xbf16>
    %30 = vector.shape_cast %29 : vector<1x64x17xbf16> to vector<64x17xbf16>
    %cst_22 = arith.constant dense<0.000000e+00> : vector<8x17xf32>
    %31 = tpu.matmul %28, %30, %cst_22 {dimension_numbers = #tpu.dot_dimension_numbers<[1], [0], [0], [1], [0, 0, 1, 1], [], []>} : vector<8x64xbf16>, vector<64x17xbf16>, vector<8x17xf32> -> vector<8x17xf32>
    %c0_23 = arith.constant 0 : index
    %c0_24 = arith.constant 0 : index
    %c0_25 = arith.constant 0 : index
    %32 = vector.load %arg8[%c0_23, %c0_24, %c0_25] : memref<3x1x17xf32, #tpu.memory_space<vmem>>, vector<1x1x17xf32>
    %33 = vector.shape_cast %32 : vector<1x1x17xf32> to vector<1x17xf32>
    %34 = vector.broadcast %33 : vector<1x17xf32> to vector<8x17xf32>
    %35 = arith.addf %31, %34 : vector<8x17xf32>
    %36 = vector.extract_strided_slice %35 {offsets = [0, 0], sizes = [8, 8], strides = [1, 1]} : vector<8x17xf32> to vector<8x8xf32>
    %37 = vector.extract_strided_slice %35 {offsets = [0, 8], sizes = [8, 8], strides = [1, 1]} : vector<8x17xf32> to vector<8x8xf32>
    %38 = vector.extract_strided_slice %35 {offsets = [0, 16], sizes = [8, 1], strides = [1, 1]} : vector<8x17xf32> to vector<8x1xf32>
    %c0_26 = arith.constant 0 : index
    %c0_27 = arith.constant 0 : index
    %c0_28 = arith.constant 0 : index
    %39 = vector.load %arg2[%c0_26, %c0_27, %c0_28] : memref<3x16x16xf32, #tpu.memory_space<vmem>>, vector<1x16x16xf32>
    %40 = vector.shape_cast %39 : vector<1x16x16xf32> to vector<16x16xf32>
    %cst_29 = arith.constant dense<0.000000e+00> : vector<8x16xf32>
    %41 = tpu.matmul %0, %40, %cst_29 {dimension_numbers = #tpu.dot_dimension_numbers<[1], [0], [0], [1], [0, 0, 1, 1], [], []>} : vector<8x16xf32>, vector<16x16xf32>, vector<8x16xf32> -> vector<8x16xf32>
    %42 = vector.extract_strided_slice %41 {offsets = [0, 0], sizes = [8, 8], strides = [1, 1]} : vector<8x16xf32> to vector<8x8xf32>
    %43 = vector.extract_strided_slice %41 {offsets = [0, 8], sizes = [8, 8], strides = [1, 1]} : vector<8x16xf32> to vector<8x8xf32>
    %44 = math.exp %36 : vector<8x8xf32>
    %45 = arith.mulf %44, %43 : vector<8x8xf32>
    %46 = arith.addf %45, %37 : vector<8x8xf32>
    %47 = tpu.concatenate %42, %46 in 1 : vector<8x8xf32>, vector<8x8xf32> -> vector<8x16xf32>
    %48 = arith.addf %1, %38 : vector<8x1xf32>
    %49 = arith.truncf %47 : vector<8x16xf32> to vector<8x16xbf16>
    %c1 = arith.constant 1 : index
    %c0_30 = arith.constant 0 : index
    %c0_31 = arith.constant 0 : index
    %50 = vector.load %arg3[%c1, %c0_30, %c0_31] : memref<3x16x64xbf16, #tpu.memory_space<vmem>>, vector<1x16x64xbf16>
    %51 = vector.shape_cast %50 : vector<1x16x64xbf16> to vector<16x64xbf16>
    %cst_32 = arith.constant dense<0.000000e+00> : vector<8x64xf32>
    %52 = tpu.matmul %49, %51, %cst_32 {dimension_numbers = #tpu.dot_dimension_numbers<[1], [0], [0], [1], [0, 0, 1, 1], [], []>} : vector<8x16xbf16>, vector<16x64xbf16>, vector<8x64xf32> -> vector<8x64xf32>
    %c1_33 = arith.constant 1 : index
    %c0_34 = arith.constant 0 : index
    %c0_35 = arith.constant 0 : index
    %53 = vector.load %arg4[%c1_33, %c0_34, %c0_35] : memref<3x1x64xf32, #tpu.memory_space<vmem>>, vector<1x1x64xf32>
    %54 = vector.shape_cast %53 : vector<1x1x64xf32> to vector<1x64xf32>
    %55 = vector.broadcast %54 : vector<1x64xf32> to vector<8x64xf32>
    %56 = arith.addf %52, %55 : vector<8x64xf32>
    %cst_36 = arith.constant 0.000000e+00 : f32
    %57 = vector.broadcast %cst_36 : f32 to vector<8x64xf32>
    %58 = arith.cmpf ogt, %56, %57 : vector<8x64xf32>
    %cst_37 = arith.constant 0.00999999977 : f32
    %59 = vector.broadcast %cst_37 : f32 to vector<8x64xf32>
    %60 = arith.mulf %59, %56 : vector<8x64xf32>
    %61 = arith.select %58, %56, %60 : vector<8x64xi1>, vector<8x64xf32>
    %62 = arith.truncf %61 : vector<8x64xf32> to vector<8x64xbf16>
    %c1_38 = arith.constant 1 : index
    %c0_39 = arith.constant 0 : index
    %c0_40 = arith.constant 0 : index
    %63 = vector.load %arg5[%c1_38, %c0_39, %c0_40] : memref<3x64x64xbf16, #tpu.memory_space<vmem>>, vector<1x64x64xbf16>
    %64 = vector.shape_cast %63 : vector<1x64x64xbf16> to vector<64x64xbf16>
    %cst_41 = arith.constant dense<0.000000e+00> : vector<8x64xf32>
    %65 = tpu.matmul %62, %64, %cst_41 {dimension_numbers = #tpu.dot_dimension_numbers<[1], [0], [0], [1], [0, 0, 1, 1], [], []>} : vector<8x64xbf16>, vector<64x64xbf16>, vector<8x64xf32> -> vector<8x64xf32>
    %c1_42 = arith.constant 1 : index
    %c0_43 = arith.constant 0 : index
    %c0_44 = arith.constant 0 : index
    %66 = vector.load %arg6[%c1_42, %c0_43, %c0_44] : memref<3x1x64xf32, #tpu.memory_space<vmem>>, vector<1x1x64xf32>
    %67 = vector.shape_cast %66 : vector<1x1x64xf32> to vector<1x64xf32>
    %68 = vector.broadcast %67 : vector<1x64xf32> to vector<8x64xf32>
    %69 = arith.addf %65, %68 : vector<8x64xf32>
    %cst_45 = arith.constant 0.000000e+00 : f32
    %70 = vector.broadcast %cst_45 : f32 to vector<8x64xf32>
    %71 = arith.cmpf ogt, %69, %70 : vector<8x64xf32>
    %cst_46 = arith.constant 0.00999999977 : f32
    %72 = vector.broadcast %cst_46 : f32 to vector<8x64xf32>
    %73 = arith.mulf %72, %69 : vector<8x64xf32>
    %74 = arith.select %71, %69, %73 : vector<8x64xi1>, vector<8x64xf32>
    %75 = arith.truncf %74 : vector<8x64xf32> to vector<8x64xbf16>
    %c1_47 = arith.constant 1 : index
    %c0_48 = arith.constant 0 : index
    %c0_49 = arith.constant 0 : index
    %76 = vector.load %arg7[%c1_47, %c0_48, %c0_49] : memref<3x64x17xbf16, #tpu.memory_space<vmem>>, vector<1x64x17xbf16>
    %77 = vector.shape_cast %76 : vector<1x64x17xbf16> to vector<64x17xbf16>
    %cst_50 = arith.constant dense<0.000000e+00> : vector<8x17xf32>
    %78 = tpu.matmul %75, %77, %cst_50 {dimension_numbers = #tpu.dot_dimension_numbers<[1], [0], [0], [1], [0, 0, 1, 1], [], []>} : vector<8x64xbf16>, vector<64x17xbf16>, vector<8x17xf32> -> vector<8x17xf32>
    %c1_51 = arith.constant 1 : index
    %c0_52 = arith.constant 0 : index
    %c0_53 = arith.constant 0 : index
    %79 = vector.load %arg8[%c1_51, %c0_52, %c0_53] : memref<3x1x17xf32, #tpu.memory_space<vmem>>, vector<1x1x17xf32>
    %80 = vector.shape_cast %79 : vector<1x1x17xf32> to vector<1x17xf32>
    %81 = vector.broadcast %80 : vector<1x17xf32> to vector<8x17xf32>
    %82 = arith.addf %78, %81 : vector<8x17xf32>
    %83 = vector.extract_strided_slice %82 {offsets = [0, 0], sizes = [8, 8], strides = [1, 1]} : vector<8x17xf32> to vector<8x8xf32>
    %84 = vector.extract_strided_slice %82 {offsets = [0, 8], sizes = [8, 8], strides = [1, 1]} : vector<8x17xf32> to vector<8x8xf32>
    %85 = vector.extract_strided_slice %82 {offsets = [0, 16], sizes = [8, 1], strides = [1, 1]} : vector<8x17xf32> to vector<8x1xf32>
    %c1_54 = arith.constant 1 : index
    %c0_55 = arith.constant 0 : index
    %c0_56 = arith.constant 0 : index
    %86 = vector.load %arg2[%c1_54, %c0_55, %c0_56] : memref<3x16x16xf32, #tpu.memory_space<vmem>>, vector<1x16x16xf32>
    %87 = vector.shape_cast %86 : vector<1x16x16xf32> to vector<16x16xf32>
    %cst_57 = arith.constant dense<0.000000e+00> : vector<8x16xf32>
    %88 = tpu.matmul %47, %87, %cst_57 {dimension_numbers = #tpu.dot_dimension_numbers<[1], [0], [0], [1], [0, 0, 1, 1], [], []>} : vector<8x16xf32>, vector<16x16xf32>, vector<8x16xf32> -> vector<8x16xf32>
    %89 = vector.extract_strided_slice %88 {offsets = [0, 0], sizes = [8, 8], strides = [1, 1]} : vector<8x16xf32> to vector<8x8xf32>
    %90 = vector.extract_strided_slice %88 {offsets = [0, 8], sizes = [8, 8], strides = [1, 1]} : vector<8x16xf32> to vector<8x8xf32>
    %91 = math.exp %83 : vector<8x8xf32>
    %92 = arith.mulf %91, %90 : vector<8x8xf32>
    %93 = arith.addf %92, %84 : vector<8x8xf32>
    %94 = tpu.concatenate %93, %89 in 1 : vector<8x8xf32>, vector<8x8xf32> -> vector<8x16xf32>
    %95 = arith.addf %48, %85 : vector<8x1xf32>
    %96 = arith.truncf %94 : vector<8x16xf32> to vector<8x16xbf16>
    %c2 = arith.constant 2 : index
    %c0_58 = arith.constant 0 : index
    %c0_59 = arith.constant 0 : index
    %97 = vector.load %arg3[%c2, %c0_58, %c0_59] : memref<3x16x64xbf16, #tpu.memory_space<vmem>>, vector<1x16x64xbf16>
    %98 = vector.shape_cast %97 : vector<1x16x64xbf16> to vector<16x64xbf16>
    %cst_60 = arith.constant dense<0.000000e+00> : vector<8x64xf32>
    %99 = tpu.matmul %96, %98, %cst_60 {dimension_numbers = #tpu.dot_dimension_numbers<[1], [0], [0], [1], [0, 0, 1, 1], [], []>} : vector<8x16xbf16>, vector<16x64xbf16>, vector<8x64xf32> -> vector<8x64xf32>
    %c2_61 = arith.constant 2 : index
    %c0_62 = arith.constant 0 : index
    %c0_63 = arith.constant 0 : index
    %100 = vector.load %arg4[%c2_61, %c0_62, %c0_63] : memref<3x1x64xf32, #tpu.memory_space<vmem>>, vector<1x1x64xf32>
    %101 = vector.shape_cast %100 : vector<1x1x64xf32> to vector<1x64xf32>
    %102 = vector.broadcast %101 : vector<1x64xf32> to vector<8x64xf32>
    %103 = arith.addf %99, %102 : vector<8x64xf32>
    %cst_64 = arith.constant 0.000000e+00 : f32
    %104 = vector.broadcast %cst_64 : f32 to vector<8x64xf32>
    %105 = arith.cmpf ogt, %103, %104 : vector<8x64xf32>
    %cst_65 = arith.constant 0.00999999977 : f32
    %106 = vector.broadcast %cst_65 : f32 to vector<8x64xf32>
    %107 = arith.mulf %106, %103 : vector<8x64xf32>
    %108 = arith.select %105, %103, %107 : vector<8x64xi1>, vector<8x64xf32>
    %109 = arith.truncf %108 : vector<8x64xf32> to vector<8x64xbf16>
    %c2_66 = arith.constant 2 : index
    %c0_67 = arith.constant 0 : index
    %c0_68 = arith.constant 0 : index
    %110 = vector.load %arg5[%c2_66, %c0_67, %c0_68] : memref<3x64x64xbf16, #tpu.memory_space<vmem>>, vector<1x64x64xbf16>
    %111 = vector.shape_cast %110 : vector<1x64x64xbf16> to vector<64x64xbf16>
    %cst_69 = arith.constant dense<0.000000e+00> : vector<8x64xf32>
    %112 = tpu.matmul %109, %111, %cst_69 {dimension_numbers = #tpu.dot_dimension_numbers<[1], [0], [0], [1], [0, 0, 1, 1], [], []>} : vector<8x64xbf16>, vector<64x64xbf16>, vector<8x64xf32> -> vector<8x64xf32>
    %c2_70 = arith.constant 2 : index
    %c0_71 = arith.constant 0 : index
    %c0_72 = arith.constant 0 : index
    %113 = vector.load %arg6[%c2_70, %c0_71, %c0_72] : memref<3x1x64xf32, #tpu.memory_space<vmem>>, vector<1x1x64xf32>
    %114 = vector.shape_cast %113 : vector<1x1x64xf32> to vector<1x64xf32>
    %115 = vector.broadcast %114 : vector<1x64xf32> to vector<8x64xf32>
    %116 = arith.addf %112, %115 : vector<8x64xf32>
    %cst_73 = arith.constant 0.000000e+00 : f32
    %117 = vector.broadcast %cst_73 : f32 to vector<8x64xf32>
    %118 = arith.cmpf ogt, %116, %117 : vector<8x64xf32>
    %cst_74 = arith.constant 0.00999999977 : f32
    %119 = vector.broadcast %cst_74 : f32 to vector<8x64xf32>
    %120 = arith.mulf %119, %116 : vector<8x64xf32>
    %121 = arith.select %118, %116, %120 : vector<8x64xi1>, vector<8x64xf32>
    %122 = arith.truncf %121 : vector<8x64xf32> to vector<8x64xbf16>
    %c2_75 = arith.constant 2 : index
    %c0_76 = arith.constant 0 : index
    %c0_77 = arith.constant 0 : index
    %123 = vector.load %arg7[%c2_75, %c0_76, %c0_77] : memref<3x64x17xbf16, #tpu.memory_space<vmem>>, vector<1x64x17xbf16>
    %124 = vector.shape_cast %123 : vector<1x64x17xbf16> to vector<64x17xbf16>
    %cst_78 = arith.constant dense<0.000000e+00> : vector<8x17xf32>
    %125 = tpu.matmul %122, %124, %cst_78 {dimension_numbers = #tpu.dot_dimension_numbers<[1], [0], [0], [1], [0, 0, 1, 1], [], []>} : vector<8x64xbf16>, vector<64x17xbf16>, vector<8x17xf32> -> vector<8x17xf32>
    %c2_79 = arith.constant 2 : index
    %c0_80 = arith.constant 0 : index
    %c0_81 = arith.constant 0 : index
    %126 = vector.load %arg8[%c2_79, %c0_80, %c0_81] : memref<3x1x17xf32, #tpu.memory_space<vmem>>, vector<1x1x17xf32>
    %127 = vector.shape_cast %126 : vector<1x1x17xf32> to vector<1x17xf32>
    %128 = vector.broadcast %127 : vector<1x17xf32> to vector<8x17xf32>
    %129 = arith.addf %125, %128 : vector<8x17xf32>
    %130 = vector.extract_strided_slice %129 {offsets = [0, 0], sizes = [8, 8], strides = [1, 1]} : vector<8x17xf32> to vector<8x8xf32>
    %131 = vector.extract_strided_slice %129 {offsets = [0, 8], sizes = [8, 8], strides = [1, 1]} : vector<8x17xf32> to vector<8x8xf32>
    %132 = vector.extract_strided_slice %129 {offsets = [0, 16], sizes = [8, 1], strides = [1, 1]} : vector<8x17xf32> to vector<8x1xf32>
    %c2_82 = arith.constant 2 : index
    %c0_83 = arith.constant 0 : index
    %c0_84 = arith.constant 0 : index
    %133 = vector.load %arg2[%c2_82, %c0_83, %c0_84] : memref<3x16x16xf32, #tpu.memory_space<vmem>>, vector<1x16x16xf32>
    %134 = vector.shape_cast %133 : vector<1x16x16xf32> to vector<16x16xf32>
    %cst_85 = arith.constant dense<0.000000e+00> : vector<8x16xf32>
    %135 = tpu.matmul %94, %134, %cst_85 {dimension_numbers = #tpu.dot_dimension_numbers<[1], [0], [0], [1], [0, 0, 1, 1], [], []>} : vector<8x16xf32>, vector<16x16xf32>, vector<8x16xf32> -> vector<8x16xf32>
    %136 = vector.extract_strided_slice %135 {offsets = [0, 0], sizes = [8, 8], strides = [1, 1]} : vector<8x16xf32> to vector<8x8xf32>
    %137 = vector.extract_strided_slice %135 {offsets = [0, 8], sizes = [8, 8], strides = [1, 1]} : vector<8x16xf32> to vector<8x8xf32>
    %138 = math.exp %130 : vector<8x8xf32>
    %139 = arith.mulf %138, %137 : vector<8x8xf32>
    %140 = arith.addf %139, %131 : vector<8x8xf32>
    %141 = tpu.concatenate %136, %140 in 1 : vector<8x8xf32>, vector<8x8xf32> -> vector<8x16xf32>
    %142 = arith.addf %95, %132 : vector<8x1xf32>
    %143 = tpu.concatenate %0, %47, %94, %141, %142 in 1 : vector<8x16xf32>, vector<8x16xf32>, vector<8x16xf32>, vector<8x16xf32>, vector<8x1xf32> -> vector<8x65xf32>
    %c0_86 = arith.constant 0 : index
    %c0_87 = arith.constant 0 : index
    %144 = vector.load %arg9[%c0_86, %c0_87] : memref<8x65xf32, #tpu.memory_space<vmem>>, vector<8x65xf32>
    tpu.vector_store %arg9[%c0_86, %c0_87], %143 {strides = array<i32>} : memref<8x65xf32, #tpu.memory_space<vmem>>, vector<8x65xf32>,
    return
  }
  func.func @transform_0(%arg0: i32) -> (i32, i32) {
    %c0_i32 = arith.constant 0 : i32
    %c0_i32_0 = arith.constant 0 : i32
    return %arg0, %c0_i32 : i32, i32
  }
  func.func @transform_1(%arg0: i32) -> (i32, i32, i32) {
    %c0_i32 = arith.constant 0 : i32
    %c0_i32_0 = arith.constant 0 : i32
    %c0_i32_1 = arith.constant 0 : i32
    %c0_i32_2 = arith.constant 0 : i32
    return %c0_i32, %c0_i32_0, %c0_i32_1 : i32, i32, i32
  }
  func.func @transform_2(%arg0: i32) -> (i32, i32, i32) {
    %c0_i32 = arith.constant 0 : i32
    %c0_i32_0 = arith.constant 0 : i32
    %c0_i32_1 = arith.constant 0 : i32
    %c0_i32_2 = arith.constant 0 : i32
    return %c0_i32, %c0_i32_0, %c0_i32_1 : i32, i32, i32
  }
  func.func @transform_3(%arg0: i32) -> (i32, i32, i32) {
    %c0_i32 = arith.constant 0 : i32
    %c0_i32_0 = arith.constant 0 : i32
    %c0_i32_1 = arith.constant 0 : i32
    %c0_i32_2 = arith.constant 0 : i32
    return %c0_i32, %c0_i32_0, %c0_i32_1 : i32, i32, i32
  }
  func.func @transform_4(%arg0: i32) -> (i32, i32, i32) {
    %c0_i32 = arith.constant 0 : i32
    %c0_i32_0 = arith.constant 0 : i32
    %c0_i32_1 = arith.constant 0 : i32
    %c0_i32_2 = arith.constant 0 : i32
    return %c0_i32, %c0_i32_0, %c0_i32_1 : i32, i32, i32
  }
  func.func @transform_5(%arg0: i32) -> (i32, i32, i32) {
    %c0_i32 = arith.constant 0 : i32
    %c0_i32_0 = arith.constant 0 : i32
    %c0_i32_1 = arith.constant 0 : i32
    %c0_i32_2 = arith.constant 0 : i32
    return %c0_i32, %c0_i32_0, %c0_i32_1 : i32, i32, i32
  }
  func.func @transform_6(%arg0: i32) -> (i32, i32, i32) {
    %c0_i32 = arith.constant 0 : i32
    %c0_i32_0 = arith.constant 0 : i32
    %c0_i32_1 = arith.constant 0 : i32
    %c0_i32_2 = arith.constant 0 : i32
    return %c0_i32, %c0_i32_0, %c0_i32_1 : i32, i32, i32
  }
  func.func @transform_7(%arg0: i32) -> (i32, i32, i32) {
    %c0_i32 = arith.constant 0 : i32
    %c0_i32_0 = arith.constant 0 : i32
    %c0_i32_1 = arith.constant 0 : i32
    %c0_i32_2 = arith.constant 0 : i32
    return %c0_i32, %c0_i32_0, %c0_i32_1 : i32, i32, i32
  }
  func.func @transform_8(%arg0: i32) -> (i32, i32) {
    %c0_i32 = arith.constant 0 : i32
    %c0_i32_0 = arith.constant 0 : i32
    return %arg0, %c0_i32 : i32, i32
  }
}

</mosaic_0001>

<llo_original>
// kernel: normalizing_flow_forward.1
$region0: #{normalizing_flow_forward.1}
  #allocation0 [shape = 'u32[]', space=smem, size = 0x4, offset = 0x4, fixed_abs, tag = 'smem constant byte address 0x4 - core index']
  #allocation1 [shape = 'u32[72,128]{1,0:T(1,128)}', space=vmem, size = 0x9000, scoped, tag = 'internal scratch']
  %s0 = inlined_call_operand.vmem [shape: f32[8,16], index: 0, kind: input, shape index: {}]
  %s1 = inlined_call_operand.hbm [shape: f32[3,16,16], index: 1, kind: input, shape index: {}]
  %s2 = inlined_call_operand.vmem [shape: bf16[3,16,64], index: 2, kind: input, shape index: {}]
  %s3 = inlined_call_operand.vmem [shape: f32[3,1,64], index: 3, kind: input, shape index: {}]
  %s4 = inlined_call_operand.vmem [shape: bf16[3,64,64], index: 4, kind: input, shape index: {}]
  %s5 = inlined_call_operand.hbm [shape: f32[3,1,64], index: 5, kind: input, shape index: {}]
  %s6 = inlined_call_operand.vmem [shape: bf16[3,64,17], index: 6, kind: input, shape index: {}]
  %s7 = inlined_call_operand.vmem [shape: f32[3,1,17], index: 7, kind: input, shape index: {}]
  %s8 = inlined_call_operand.vmem [shape: f32[8,65], index: 8, kind: output, shape index: {}]
  %s9 = sld [smem:[#allocation0]]
  $region50: #{normalizing_flow_forward.1} parent=0
    _
  %s11 = ssub.s32 1, %s9
  %s12 = scalar_select 0, %s11, %s9
  $region1: #{normalizing_flow_forward.1} parent=0
    #allocation2 [shape = 'u8[24576]{0}', space=vmem, size = 0x6000, scoped, tag = 'input window, operand 1, single buffered']
    #allocation3 [shape = 's32[1]{0}', space=sflag, size = 0x4, scoped, tag = 'scoped memory for normalizing_flow_forward.1']
    #allocation4 [shape = 'u8[1536]{0}', space=vmem, size = 0x800, scoped, tag = 'input window, operand 5, single buffered']
    #allocation5 [shape = 's32[1]{0}', space=sflag, size = 0x4, scoped, tag = 'scoped memory for normalizing_flow_forward.1']
    %13 = vsyncpa [#allocation3], 0
    %14 = vsyncpa [#allocation5], 0
    // Predicated region
    $region2: #{normalizing_flow_forward.1} parent=1 // pred_check
      _
    $region3: #{normalizing_flow_forward.1} parent=1 // pred_check_branch
      %16 = sbr.rel (0) target = $region5
    $region4: #{normalizing_flow_forward.1} parent=1 // pred_region
      _
    $region5: #{normalizing_flow_forward.1} parent=1 // pred_fallthru
      _
    // Predicated region
    $region6: #{normalizing_flow_forward.1} parent=1 // pred_check
      _
    $region7: #{normalizing_flow_forward.1} parent=1 // pred_check_branch
      %18 = sbr.rel (0) target = $region9
    $region8: #{normalizing_flow_forward.1} parent=1 // pred_region
      %20 = vsyncadd [#allocation3], 0
      %s21 = sshll.u32 %s1, 4
      %s22 = int_to_ptr.hbm [resolvable:$true] %s21
      %s23 = sshll.u32 [#allocation2], 4
      %s24 = int_to_ptr.vmem [resolvable:$true] %s23
      %29 = dma.hbm_to_vmem [thread:$0]  %s22, 768, %s24, [#allocation3], 128, 128, 8
    $region9: #{normalizing_flow_forward.1} parent=1 // pred_fallthru
      _
    // Predicated region
    $region10: #{normalizing_flow_forward.1} parent=1 // pred_check
      _
    $region11: #{normalizing_flow_forward.1} parent=1 // pred_check_branch
      %31 = sbr.rel (0) target = $region13
    $region12: #{normalizing_flow_forward.1} parent=1 // pred_region
      _
    $region13: #{normalizing_flow_forward.1} parent=1 // pred_fallthru
      _
    // Predicated region
    $region14: #{normalizing_flow_forward.1} parent=1 // pred_check
      _
    $region15: #{normalizing_flow_forward.1} parent=1 // pred_check_branch
      %33 = sbr.rel (0) target = $region17
    $region16: #{normalizing_flow_forward.1} parent=1 // pred_region
      _
    $region17: #{normalizing_flow_forward.1} parent=1 // pred_fallthru
      _
    // Predicated region
    $region18: #{normalizing_flow_forward.1} parent=1 // pred_check
      _
    $region19: #{normalizing_flow_forward.1} parent=1 // pred_check_branch
      %35 = sbr.rel (0) target = $region21
    $region20: #{normalizing_flow_forward.1} parent=1 // pred_region
      _
    $region21: #{normalizing_flow_forward.1} parent=1 // pred_fallthru
      _
    // Predicated region
    $region22: #{normalizing_flow_forward.1} parent=1 // pred_check
      _
    $region23: #{normalizing_flow_forward.1} parent=1 // pred_check_branch
      %37 = sbr.rel (0) target = $region25
    $region24: #{normalizing_flow_forward.1} parent=1 // pred_region
      %39 = vsyncadd [#allocation5], 0
      %s40 = sshll.u32 %s5, 4
      %s41 = int_to_ptr.hbm [resolvable:$true] %s40
      %s42 = sshll.u32 [#allocation4], 4
      %s43 = int_to_ptr.vmem [resolvable:$true] %s42
      %48 = dma.hbm_to_vmem [thread:$0]  %s41, 48, %s43, [#allocation5], 16, 16, 1
    $region25: #{normalizing_flow_forward.1} parent=1 // pred_fallthru
      _
    // Predicated region
    $region26: #{normalizing_flow_forward.1} parent=1 // pred_check
      _
    $region27: #{normalizing_flow_forward.1} parent=1 // pred_check_branch
      %50 = sbr.rel (0) target = $region29
    $region28: #{normalizing_flow_forward.1} parent=1 // pred_region
      _
    $region29: #{normalizing_flow_forward.1} parent=1 // pred_fallthru
      _
    // Predicated region
    $region30: #{normalizing_flow_forward.1} parent=1 // pred_check
      _
    $region31: #{normalizing_flow_forward.1} parent=1 // pred_check_branch
      %52 = sbr.rel (0) target = $region33
    $region32: #{normalizing_flow_forward.1} parent=1 // pred_region
      _
    $region33: #{normalizing_flow_forward.1} parent=1 // pred_fallthru
      _
    // Predicated region
    $region34: #{normalizing_flow_forward.1} parent=1 // pred_check
      _
    $region35: #{normalizing_flow_forward.1} parent=1 // pred_check_branch
      %54 = sbr.rel (0) target = $region37
    $region36: #{normalizing_flow_forward.1} parent=1 // pred_region
      %56 = dma.done [#allocation3], 768
    $region37: #{normalizing_flow_forward.1} parent=1 // pred_fallthru
      _
    // Predicated region
    $region38: #{normalizing_flow_forward.1} parent=1 // pred_check
      _
    $region39: #{normalizing_flow_forward.1} parent=1 // pred_check_branch
      %58 = sbr.rel (0) target = $region41
    $region40: #{normalizing_flow_forward.1} parent=1 // pred_region
      %60 = dma.done [#allocation5], 48
    $region41: #{normalizing_flow_forward.1} parent=1 // pred_fallthru
      _
    %v62 = vld [vmem:[%s0] sm:$0xff]
    %v63 = vpack.c.bf16 %v62, %v62
    %v64 = vld [vmem:[%s2] sm:$0xf]
    %v65 = vld [vmem:[%s2 + $0x4] sm:$0xf]
    %v66 = vld [vmem:[%s3] sm:$0x1]
    %v68 = vperm.slane %v66, 0
    %v72 = vunpack.c.l.b16 %v64
    %v73 = vunpack.c.l.b16 %v65
    %v74 = vpack.c.b16 %v73, %v72
    %vm76 = vcmask 130048
    %v78 = vsel %vm76, %v63, 0
    %80 = vmatpush.bf16.msra.mxu0 0
    %81 = vmatpush.bf16.msra.mxu0 0
    %82 = vmatpush.bf16.msra.mxu0 0
    %83 = vmatpush.bf16.msra.mxu0 0
    %84 = vmatpush.bf16.msra.mxu0 0
    %85 = vmatpush.bf16.msra.mxu0 0
    %86 = vmatpush.bf16.msra.mxu0 0
    %87 = vmatpush.bf16.msra.mxu0 %v74
    %88 = vmatmul.bf16.gmra.mxu0 %v78
    %v89 = vpop.f32.mrf.mxu0
    %v90 = vadd.f32 %v68, %v89
    %v91 = vpop.f32.mrf.mxu0
    %92 = vdwg.mxu0
    %vm93 = vcmp.gt.f32.partialorder %v90, 0.0
    %v94 = vmul.f32 %v90, 0.01
    %v95 = vsel %vm93, %v90, %v94
    %v96 = vpack.c.bf16 %v95, %v95
    %v97 = vld [vmem:[%s4] sm:$0xf]
    %v98 = vld [vmem:[%s4 + $0x4] sm:$0xf]
    %v99 = vld [vmem:[%s4 + $0x8] sm:$0xf]
    %v100 = vld [vmem:[%s4 + $0xc] sm:$0xf]
    %v101 = vld [vmem:[%s4 + $0x10] sm:$0xf]
    %v102 = vld [vmem:[%s4 + $0x14] sm:$0xf]
    %v103 = vld [vmem:[%s4 + $0x18] sm:$0xf]
    %v104 = vld [vmem:[%s4 + $0x1c] sm:$0xf]
    %v105 = vld [vmem:[#allocation4] sm:$0x1]
    %v107 = vperm.slane %v105, 0
    %v117 = vunpack.c.l.b16 %v97
    %v118 = vunpack.c.l.b16 %v98
    %v119 = vunpack.c.l.b16 %v99
    %v120 = vunpack.c.l.b16 %v100
    %v121 = vunpack.c.l.b16 %v101
    %v122 = vunpack.c.l.b16 %v102
    %v123 = vunpack.c.l.b16 %v103
    %v124 = vunpack.c.l.b16 %v104
    %v125 = vpack.c.b16 %v118, %v117
    %v126 = vpack.c.b16 %v120, %v119
    %v127 = vpack.c.b16 %v122, %v121
    %v128 = vpack.c.b16 %v124, %v123
    %vm133 = vcmask 523264
    %v135 = vsel %vm133, %v96, 0
    %137 = vmatpush.bf16.msra.mxu0 0
    %138 = vmatpush.bf16.msra.mxu0 0
    %139 = vmatpush.bf16.msra.mxu0 0
    %140 = vmatpush.bf16.msra.mxu0 0
    %141 = vmatpush.bf16.msra.mxu0 %v128
    %142 = vmatpush.bf16.msra.mxu0 %v127
    %143 = vmatpush.bf16.msra.mxu0 %v126
    %144 = vmatpush.bf16.msra.mxu0 %v125
    %145 = vmatmul.bf16.gmra.mxu0 %v135
    %v146 = vpop.f32.mrf.mxu0
    %v147 = vadd.f32 %v107, %v146
    %v148 = vpop.f32.mrf.mxu0
    %149 = vdwg.mxu0
    %vm150 = vcmp.gt.f32.partialorder %v147, 0.0
    %v151 = vmul.f32 %v147, 0.01
    %v152 = vsel %vm150, %v147, %v151
    %v153 = vpack.c.bf16 %v152, %v152
    %v154 = vld [vmem:[%s6] sm:$0xf]
    %v155 = vld [vmem:[%s6 + $0x4] sm:$0xf]
    %v156 = vld [vmem:[%s6 + $0x8] sm:$0xf]
    %v157 = vld [vmem:[%s6 + $0xc] sm:$0xf]
    %v158 = vld [vmem:[%s6 + $0x10] sm:$0xf]
    %v159 = vld [vmem:[%s6 + $0x14] sm:$0xf]
    %v160 = vld [vmem:[%s6 + $0x18] sm:$0xf]
    %v161 = vld [vmem:[%s6 + $0x1c] sm:$0xf]
    %v162 = vld [vmem:[%s7] sm:$0x1]
    %v164 = vperm.slane %v162, 0
    %v174 = vunpack.c.l.b16 %v154
    %v175 = vunpack.c.l.b16 %v155
    %v176 = vunpack.c.l.b16 %v156
    %v177 = vunpack.c.l.b16 %v157
    %v178 = vunpack.c.l.b16 %v158
    %v179 = vunpack.c.l.b16 %v159
    %v180 = vunpack.c.l.b16 %v160
    %v181 = vunpack.c.l.b16 %v161
    %v182 = vpack.c.b16 %v175, %v174
    %v183 = vpack.c.b16 %v177, %v176
    %v184 = vpack.c.b16 %v179, %v178
    %v185 = vpack.c.b16 %v181, %v180
    %v191 = vsel %vm133, %v153, 0
    %193 = vmatpush.bf16.msra.mxu0 0
    %194 = vmatpush.bf16.msra.mxu0 0
    %195 = vmatpush.bf16.msra.mxu0 0
    %196 = vmatpush.bf16.msra.mxu0 0
    %197 = vmatpush.bf16.msra.mxu0 %v185
    %198 = vmatpush.bf16.msra.mxu0 %v184
    %199 = vmatpush.bf16.msra.mxu0 %v183
    %200 = vmatpush.bf16.msra.mxu0 %v182
    %201 = vmatmul.bf16.gmra.mxu0 %v191
    %v202 = vpop.f32.mrf.mxu0
    %v203 = vadd.f32 %v164, %v202
    %v204 = vpop.f32.mrf.mxu0
    %205 = vdwg.mxu0
    %v206 = vld [vmem:[#allocation2] sm:$0xff]
    %v207 = vld [vmem:[#allocation2 + $0x8] sm:$0xff]
    %v209 = vsel %vm76, %v62, 0
    %211 = vmatpush.msra.mxu0 0.0
    %212 = vmatpush.msra.mxu0 0.0
    %213 = vmatpush.msra.mxu0 0.0
    %214 = vmatpush.msra.mxu0 0.0
    %215 = vmatpush.msra.mxu0 0.0
    %216 = vmatpush.msra.mxu0 0.0
    %217 = vmatpush.msra.mxu0 0.0
    %218 = vmatpush.msra.mxu0 0.0
    %219 = vmatpush.msra.mxu0 0.0
    %220 = vmatpush.msra.mxu0 0.0
    %221 = vmatpush.msra.mxu0 0.0
    %222 = vmatpush.msra.mxu0 0.0
    %223 = vmatpush.msra.mxu0 0.0
    %224 = vmatpush.msra.mxu0 0.0
    %225 = vmatpush.msra.mxu0 %v207
    %226 = vmatpush.msra.mxu0 %v206
    %227 = vmatmul.f32.gmra.mxu0 %v209
    %v228 = vpop.f32.mrf.mxu0
    %v229 = vadd.f32 0.0, %v228
    %230 = vdwg.mxu0
    %v231 = vmul.f32 %v203, 1.442695
    %v232 = vpow.pop %v231
    %234 = vrot.lane.b32.xlu0 %v229, 120
    %v235 = vpop.permute.xlu0 %234
    %v237 = vmul.f32 %v232, %v235
    %239 = vrot.lane.b32.xlu0 %v203, 120
    %v240 = vpop.permute.xlu0 %239
    %v242 = vadd.f32 %v237, %v240
    %244 = vrot.lane.b32.xlu0 %v242, 8
    %v245 = vpop.permute.xlu0 %244
    %vm247 = vcmask 64512
    %v248 = vsel %vm247, %v229, %v245
    %v249 = vadd.f32 %v203, 0.0
    %v250 = vpack.c.bf16 %v248, %v248
    %s251 = scalar_lea.vmem %s2, 8
    %v252 = vld [vmem:[%s251] sm:$0xf]
    %v253 = vld [vmem:[%s251 + $0x4] sm:$0xf]
    %s254 = scalar_lea.vmem %s3, 1
    %v255 = vld [vmem:[%s254] sm:$0x1]
    %v257 = vperm.slane %v255, 0
    %v261 = vunpack.c.l.b16 %v252
    %v262 = vunpack.c.l.b16 %v253
    %v263 = vpack.c.b16 %v262, %v261
    %v266 = vsel %vm76, %v250, 0
    %268 = vmatpush.bf16.msra.mxu0 0
    %269 = vmatpush.bf16.msra.mxu0 0
    %270 = vmatpush.bf16.msra.mxu0 0
    %271 = vmatpush.bf16.msra.mxu0 0
    %272 = vmatpush.bf16.msra.mxu0 0
    %273 = vmatpush.bf16.msra.mxu0 0
    %274 = vmatpush.bf16.msra.mxu0 0
    %275 = vmatpush.bf16.msra.mxu0 %v263
    %276 = vmatmul.bf16.gmra.mxu0 %v266
    %v277 = vpop.f32.mrf.mxu0
    %v278 = vadd.f32 %v257, %v277
    %v279 = vpop.f32.mrf.mxu0
    %280 = vdwg.mxu0
    %vm281 = vcmp.gt.f32.partialorder %v278, 0.0
    %v282 = vmul.f32 %v278, 0.01
    %v283 = vsel %vm281, %v278, %v282
    %v284 = vpack.c.bf16 %v283, %v283
    %s285 = scalar_lea.vmem %s4, 32
    %v286 = vld [vmem:[%s285] sm:$0xf]
    %v287 = vld [vmem:[%s285 + $0x4] sm:$0xf]
    %v288 = vld [vmem:[%s285 + $0x8] sm:$0xf]
    %v289 = vld [vmem:[%s285 + $0xc] sm:$0xf]
    %v290 = vld [vmem:[%s285 + $0x10] sm:$0xf]
    %v291 = vld [vmem:[%s285 + $0x14] sm:$0xf]
    %v292 = vld [vmem:[%s285 + $0x18] sm:$0xf]
    %v293 = vld [vmem:[%s285 + $0x1c] sm:$0xf]
    %s294 = scalar_lea.vmem [#allocation4], 1
    %v295 = vld [vmem:[%s294] sm:$0x1]
    %v297 = vperm.slane %v295, 0
    %v307 = vunpack.c.l.b16 %v286
    %v308 = vunpack.c.l.b16 %v287
    %v309 = vunpack.c.l.b16 %v288
    %v310 = vunpack.c.l.b16 %v289
    %v311 = vunpack.c.l.b16 %v290
    %v312 = vunpack.c.l.b16 %v291
    %v313 = vunpack.c.l.b16 %v292
    %v314 = vunpack.c.l.b16 %v293
    %v315 = vpack.c.b16 %v308, %v307
    %v316 = vpack.c.b16 %v310, %v309
    %v317 = vpack.c.b16 %v312, %v311
    %v318 = vpack.c.b16 %v314, %v313
    %v324 = vsel %vm133, %v284, 0
    %326 = vmatpush.bf16.msra.mxu0 0
    %327 = vmatpush.bf16.msra.mxu0 0
    %328 = vmatpush.bf16.msra.mxu0 0
    %329 = vmatpush.bf16.msra.mxu0 0
    %330 = vmatpush.bf16.msra.mxu0 %v318
    %331 = vmatpush.bf16.msra.mxu0 %v317
    %332 = vmatpush.bf16.msra.mxu0 %v316
    %333 = vmatpush.bf16.msra.mxu0 %v315
    %334 = vmatmul.bf16.gmra.mxu0 %v324
    %v335 = vpop.f32.mrf.mxu0
    %v336 = vadd.f32 %v297, %v335
    %v337 = vpop.f32.mrf.mxu0
    %338 = vdwg.mxu0
    %vm339 = vcmp.gt.f32.partialorder %v336, 0.0
    %v340 = vmul.f32 %v336, 0.01
    %v341 = vsel %vm339, %v336, %v340
    %v342 = vpack.c.bf16 %v341, %v341
    %s343 = scalar_lea.vmem %s6, 32
    %v344 = vld [vmem:[%s343] sm:$0xf]
    %v345 = vld [vmem:[%s343 + $0x4] sm:$0xf]
    %v346 = vld [vmem:[%s343 + $0x8] sm:$0xf]
    %v347 = vld [vmem:[%s343 + $0xc] sm:$0xf]
    %v348 = vld [vmem:[%s343 + $0x10] sm:$0xf]
    %v349 = vld [vmem:[%s343 + $0x14] sm:$0xf]
    %v350 = vld [vmem:[%s343 + $0x18] sm:$0xf]
    %v351 = vld [vmem:[%s343 + $0x1c] sm:$0xf]
    %s352 = scalar_lea.vmem %s7, 1
    %v353 = vld [vmem:[%s352] sm:$0x1]
    %v355 = vperm.slane %v353, 0
    %v365 = vunpack.c.l.b16 %v344
    %v366 = vunpack.c.l.b16 %v345
    %v367 = vunpack.c.l.b16 %v346
    %v368 = vunpack.c.l.b16 %v347
    %v369 = vunpack.c.l.b16 %v348
    %v370 = vunpack.c.l.b16 %v349
    %v371 = vunpack.c.l.b16 %v350
    %v372 = vunpack.c.l.b16 %v351
    %v373 = vpack.c.b16 %v366, %v365
    %v374 = vpack.c.b16 %v368, %v367
    %v375 = vpack.c.b16 %v370, %v369
    %v376 = vpack.c.b16 %v372, %v371
    %v382 = vsel %vm133, %v342, 0
    %384 = vmatpush.bf16.msra.mxu0 0
    %385 = vmatpush.bf16.msra.mxu0 0
    %386 = vmatpush.bf16.msra.mxu0 0
    %387 = vmatpush.bf16.msra.mxu0 0
    %388 = vmatpush.bf16.msra.mxu0 %v376
    %389 = vmatpush.bf16.msra.mxu0 %v375
    %390 = vmatpush.bf16.msra.mxu0 %v374
    %391 = vmatpush.bf16.msra.mxu0 %v373
    %392 = vmatmul.bf16.gmra.mxu0 %v382
    %v393 = vpop.f32.mrf.mxu0
    %v394 = vadd.f32 %v355, %v393
    %v395 = vpop.f32.mrf.mxu0
    %396 = vdwg.mxu0
    %s397 = scalar_lea.vmem [#allocation2], 16
    %v398 = vld [vmem:[%s397] sm:$0xff]
    %v399 = vld [vmem:[%s397 + $0x8] sm:$0xff]
    %v401 = vsel %vm76, %v248, 0
    %403 = vmatpush.msra.mxu0 0.0
    %404 = vmatpush.msra.mxu0 0.0
    %405 = vmatpush.msra.mxu0 0.0
    %406 = vmatpush.msra.mxu0 0.0
    %407 = vmatpush.msra.mxu0 0.0
    %408 = vmatpush.msra.mxu0 0.0
    %409 = vmatpush.msra.mxu0 0.0
    %410 = vmatpush.msra.mxu0 0.0
    %411 = vmatpush.msra.mxu0 0.0
    %412 = vmatpush.msra.mxu0 0.0
    %413 = vmatpush.msra.mxu0 0.0
    %414 = vmatpush.msra.mxu0 0.0
    %415 = vmatpush.msra.mxu0 0.0
    %416 = vmatpush.msra.mxu0 0.0
    %417 = vmatpush.msra.mxu0 %v399
    %418 = vmatpush.msra.mxu0 %v398
    %419 = vmatmul.f32.gmra.mxu0 %v401
    %v420 = vpop.f32.mrf.mxu0
    %v421 = vadd.f32 0.0, %v420
    %422 = vdwg.mxu0
    %v423 = vmul.f32 %v394, 1.442695
    %v424 = vpow.pop %v423
    %426 = vrot.lane.b32.xlu0 %v421, 120
    %v427 = vpop.permute.xlu0 %426
    %v429 = vmul.f32 %v424, %v427
    %431 = vrot.lane.b32.xlu0 %v394, 120
    %v432 = vpop.permute.xlu0 %431
    %v434 = vadd.f32 %v429, %v432
    %435 = vrot.lane.b32.xlu0 %v421, 8
    %v436 = vpop.permute.xlu0 %435
    %v438 = vsel %vm247, %v434, %v436
    %v439 = vadd.f32 %v249, %v394
    %v440 = vpack.c.bf16 %v438, %v438
    %s441 = scalar_lea.vmem %s2, 16
    %v442 = vld [vmem:[%s441] sm:$0xf]
    %v443 = vld [vmem:[%s441 + $0x4] sm:$0xf]
    %s444 = scalar_lea.vmem %s3, 2
    %v445 = vld [vmem:[%s444] sm:$0x1]
    %v447 = vperm.slane %v445, 0
    %v451 = vunpack.c.l.b16 %v442
    %v452 = vunpack.c.l.b16 %v443
    %v453 = vpack.c.b16 %v452, %v451
    %v456 = vsel %vm76, %v440, 0
    %458 = vmatpush.bf16.msra.mxu0 0
    %459 = vmatpush.bf16.msra.mxu0 0
    %460 = vmatpush.bf16.msra.mxu0 0
    %461 = vmatpush.bf16.msra.mxu0 0
    %462 = vmatpush.bf16.msra.mxu0 0
    %463 = vmatpush.bf16.msra.mxu0 0
    %464 = vmatpush.bf16.msra.mxu0 0
    %465 = vmatpush.bf16.msra.mxu0 %v453
    %466 = vmatmul.bf16.gmra.mxu0 %v456
    %v467 = vpop.f32.mrf.mxu0
    %v468 = vadd.f32 %v447, %v467
    %v469 = vpop.f32.mrf.mxu0
    %470 = vdwg.mxu0
    %vm471 = vcmp.gt.f32.partialorder %v468, 0.0
    %v472 = vmul.f32 %v468, 0.01
    %v473 = vsel %vm471, %v468, %v472
    %v474 = vpack.c.bf16 %v473, %v473
    %s475 = scalar_lea.vmem %s4, 64
    %v476 = vld [vmem:[%s475] sm:$0xf]
    %v477 = vld [vmem:[%s475 + $0x4] sm:$0xf]
    %v478 = vld [vmem:[%s475 + $0x8] sm:$0xf]
    %v479 = vld [vmem:[%s475 + $0xc] sm:$0xf]
    %v480 = vld [vmem:[%s475 + $0x10] sm:$0xf]
    %v481 = vld [vmem:[%s475 + $0x14] sm:$0xf]
    %v482 = vld [vmem:[%s475 + $0x18] sm:$0xf]
    %v483 = vld [vmem:[%s475 + $0x1c] sm:$0xf]
    %s484 = scalar_lea.vmem [#allocation4], 2
    %v485 = vld [vmem:[%s484] sm:$0x1]
    %v487 = vperm.slane %v485, 0
    %v497 = vunpack.c.l.b16 %v476
    %v498 = vunpack.c.l.b16 %v477
    %v499 = vunpack.c.l.b16 %v478
    %v500 = vunpack.c.l.b16 %v479
    %v501 = vunpack.c.l.b16 %v480
    %v502 = vunpack.c.l.b16 %v481
    %v503 = vunpack.c.l.b16 %v482
    %v504 = vunpack.c.l.b16 %v483
    %v505 = vpack.c.b16 %v498, %v497
    %v506 = vpack.c.b16 %v500, %v499
    %v507 = vpack.c.b16 %v502, %v501
    %v508 = vpack.c.b16 %v504, %v503
    %v514 = vsel %vm133, %v474, 0
    %516 = vmatpush.bf16.msra.mxu0 0
    %517 = vmatpush.bf16.msra.mxu0 0
    %518 = vmatpush.bf16.msra.mxu0 0
    %519 = vmatpush.bf16.msra.mxu0 0
    %520 = vmatpush.bf16.msra.mxu0 %v508
    %521 = vmatpush.bf16.msra.mxu0 %v507
    %522 = vmatpush.bf16.msra.mxu0 %v506
    %523 = vmatpush.bf16.msra.mxu0 %v505
    %524 = vmatmul.bf16.gmra.mxu0 %v514
    %v525 = vpop.f32.mrf.mxu0
    %v526 = vadd.f32 %v487, %v525
    %v527 = vpop.f32.mrf.mxu0
    %528 = vdwg.mxu0
    %vm529 = vcmp.gt.f32.partialorder %v526, 0.0
    %v530 = vmul.f32 %v526, 0.01
    %v531 = vsel %vm529, %v526, %v530
    %v532 = vpack.c.bf16 %v531, %v531
    %s533 = scalar_lea.vmem %s6, 64
    %v534 = vld [vmem:[%s533] sm:$0xf]
    %v535 = vld [vmem:[%s533 + $0x4] sm:$0xf]
    %v536 = vld [vmem:[%s533 + $0x8] sm:$0xf]
    %v537 = vld [vmem:[%s533 + $0xc] sm:$0xf]
    %v538 = vld [vmem:[%s533 + $0x10] sm:$0xf]
    %v539 = vld [vmem:[%s533 + $0x14] sm:$0xf]
    %v540 = vld [vmem:[%s533 + $0x18] sm:$0xf]
    %v541 = vld [vmem:[%s533 + $0x1c] sm:$0xf]
    %s542 = scalar_lea.vmem %s7, 2
    %v543 = vld [vmem:[%s542] sm:$0x1]
    %v545 = vperm.slane %v543, 0
    %v555 = vunpack.c.l.b16 %v534
    %v556 = vunpack.c.l.b16 %v535
    %v557 = vunpack.c.l.b16 %v536
    %v558 = vunpack.c.l.b16 %v537
    %v559 = vunpack.c.l.b16 %v538
    %v560 = vunpack.c.l.b16 %v539
    %v561 = vunpack.c.l.b16 %v540
    %v562 = vunpack.c.l.b16 %v541
    %v563 = vpack.c.b16 %v556, %v555
    %v564 = vpack.c.b16 %v558, %v557
    %v565 = vpack.c.b16 %v560, %v559
    %v566 = vpack.c.b16 %v562, %v561
    %v572 = vsel %vm133, %v532, 0
    %574 = vmatpush.bf16.msra.mxu0 0
    %575 = vmatpush.bf16.msra.mxu0 0
    %576 = vmatpush.bf16.msra.mxu0 0
    %577 = vmatpush.bf16.msra.mxu0 0
    %578 = vmatpush.bf16.msra.mxu0 %v566
    %579 = vmatpush.bf16.msra.mxu0 %v565
    %580 = vmatpush.bf16.msra.mxu0 %v564
    %581 = vmatpush.bf16.msra.mxu0 %v563
    %582 = vmatmul.bf16.gmra.mxu0 %v572
    %v583 = vpop.f32.mrf.mxu0
    %v584 = vadd.f32 %v545, %v583
    %v585 = vpop.f32.mrf.mxu0
    %586 = vdwg.mxu0
    %s587 = scalar_lea.vmem [#allocation2], 32
    %v588 = vld [vmem:[%s587] sm:$0xff]
    %v589 = vld [vmem:[%s587 + $0x8] sm:$0xff]
    %v591 = vsel %vm76, %v438, 0
    %593 = vmatpush.msra.mxu0 0.0
    %594 = vmatpush.msra.mxu0 0.0
    %595 = vmatpush.msra.mxu0 0.0
    %596 = vmatpush.msra.mxu0 0.0
    %597 = vmatpush.msra.mxu0 0.0
    %598 = vmatpush.msra.mxu0 0.0
    %599 = vmatpush.msra.mxu0 0.0
    %600 = vmatpush.msra.mxu0 0.0
    %601 = vmatpush.msra.mxu0 0.0
    %602 = vmatpush.msra.mxu0 0.0
    %603 = vmatpush.msra.mxu0 0.0
    %604 = vmatpush.msra.mxu0 0.0
    %605 = vmatpush.msra.mxu0 0.0
    %606 = vmatpush.msra.mxu0 0.0
    %607 = vmatpush.msra.mxu0 %v589
    %608 = vmatpush.msra.mxu0 %v588
    %609 = vmatmul.f32.gmra.mxu0 %v591
    %v610 = vpop.f32.mrf.mxu0
    %v611 = vadd.f32 0.0, %v610
    %612 = vdwg.mxu0
    %v613 = vmul.f32 %v584, 1.442695
    %v614 = vpow.pop %v613
    %616 = vrot.lane.b32.xlu0 %v611, 120
    %v617 = vpop.permute.xlu0 %616
    %v619 = vmul.f32 %v614, %v617
    %621 = vrot.lane.b32.xlu0 %v584, 120
    %v622 = vpop.permute.xlu0 %621
    %v624 = vadd.f32 %v619, %v622
    %626 = vrot.lane.b32.xlu0 %v624, 8
    %v627 = vpop.permute.xlu0 %626
    %v629 = vsel %vm247, %v611, %v627
    %v630 = vadd.f32 %v439, %v584
    %631 = vrot.lane.b32.xlu0 %v248, 16
    %v632 = vpop.permute.xlu0 %631
    %634 = vrot.lane.b32.xlu0 %v438, 32
    %v635 = vpop.permute.xlu0 %634
    %638 = vrot.lane.b32.xlu0 %v629, 48
    %v639 = vpop.permute.xlu0 %638
    %642 = vrot.lane.b32.xlu0 %v630, 48
    %v643 = vpop.permute.xlu0 %642
    %v645 = vsel %vm76, %v62, %v632
    %vm646 = vcmask 261120
    %v647 = vsel %vm646, %v645, %v635
    %vm648 = vcmask 392192
    %v649 = vsel %vm648, %v647, %v639
    %v650 = vsel %vm133, %v649, %v643
    %vm651 = vcmask 531456
    %652 = vst.msk [vmem:[%s8] sm:$0xff] %vm651, %v650
    // Predicated region
    $region42: #{normalizing_flow_forward.1} parent=1 // pred_check
      _
    $region43: #{normalizing_flow_forward.1} parent=1 // pred_check_branch
      %654 = sbr.rel (0) target = $region45
    $region44: #{normalizing_flow_forward.1} parent=1 // pred_region
      _
    $region45: #{normalizing_flow_forward.1} parent=1 // pred_fallthru
      _
    // Predicated region
    $region46: #{normalizing_flow_forward.1} parent=1 // pred_check
      _
    $region47: #{normalizing_flow_forward.1} parent=1 // pred_check_branch
      %656 = sbr.rel (0) target = $region49
    $region48: #{normalizing_flow_forward.1} parent=1 // pred_region
      _
    $region49: #{normalizing_flow_forward.1} parent=1 // pred_fallthru
      _
    %657 = vsyncpa [#allocation3], 1
    %658 = vsyncpa [#allocation5], 1

</llo_original>
